<compile_context>
chip_gen: v7x
topology: tpu7x:2x2x1
jax: 0.10.0
libtpu: 0.0.40
codegen_flags: <defaults>
</compile_context>

<pallas_src>
import functools

import jax
import jax.numpy as jnp
from jax.experimental import pallas as pl
from jax.experimental.pallas import tpu as pltpu

EPS = 0.003


def _round_up(x, m):
    return ((x + m - 1) // m) * m


def _choose_tile(n, block_b):
    """Pick (tb, n_pad, num_tiles).

    - Small batches (< 256 padded rows): one tile of n rounded up to 8
      (output block spans the full lane dim, so no 128 constraint).
    - Otherwise: tb is a multiple of 128, at least two tiles, and the tile
      count is nudged to be even so both v7x TensorCores get equal work.
    """
    n8 = _round_up(max(n, 1), 8)
    if n8 < 256:
        return n8, n8, 1

    block_b = max(128, _round_up(block_b, 128))
    tb = min(block_b, _round_up(pl.cdiv(n8, 2), 128))
    num_tiles = pl.cdiv(n8, tb)
    if num_tiles > 1 and num_tiles % 2 == 1:
        # Best-effort rebalance to an even tile count (v7x megacore balance).
        tb_try = _round_up(pl.cdiv(n8, num_tiles + 1), 128)
        nt_try = pl.cdiv(n8, tb_try)
        if nt_try % 2 == 0:
            tb, num_tiles = tb_try, nt_try
    n_pad = num_tiles * tb
    return tb, n_pad, num_tiles


def _value_net_kernel(x_ref, w1_ref, b1_ref, w2_ref, b2_ref, w3_ref, b3_ref,
                      o_ref):
    # fc1 + ReLU: bf16 operands on the MXU, f32 accumulation, f32 bias/ReLU.
    x = x_ref[...].astype(jnp.bfloat16)
    h1 = jnp.dot(x, w1_ref[...], preferred_element_type=jnp.float32)
    h1 = jnp.maximum(h1 + b1_ref[...], 0.0)

    # fc2 + ReLU
    h2 = jnp.dot(h1.astype(jnp.bfloat16), w2_ref[...],
                 preferred_element_type=jnp.float32)
    h2 = jnp.maximum(h2 + b2_ref[...], 0.0)

    # fc3 (256 -> 1): keep it off the MXU.  w3/b3 arrive pre-scaled by 0.001.
    # Pre-reduce 256 -> 128 lanes with a lane-aligned VPU add so the XLU
    # cross-lane reduction sees half the vregs, then lane-reduce and store
    # lane-dense: (1, TB) with batch along the lane axis.
    h2w = h2 * w3_ref[...]
    h2w = h2w[:, :128] + h2w[:, 128:]
    v = jnp.sum(h2w, axis=-1)[None, :] + b3_ref[...]
    o_ref[...] = 10.0 * jnp.tanh(v)


def prepare_params(params):
    """One-time kernel-param prep (call once, outside the jitted forward).

    bf16 copies of the MXU weights; the 0.001 fc3 scale folded into w3/b3.
    Biases stay f32.
    """
    w1, b1, w2, b2, w3, b3 = params
    return (w1.astype(jnp.bfloat16), b1.astype(jnp.float32),
            w2.astype(jnp.bfloat16), b2.astype(jnp.float32),
            (w3 * 0.001).astype(jnp.float32), (b3 * 0.001).astype(jnp.float32))


@functools.partial(jax.jit, static_argnames=("block_b",))
def value_net_forward(state, kernel_params, *, block_b=1024):
    """state: (n, state_dim) float32, kernel_params from prepare_params()
    -> (n, 1) float32."""
    w1_bf, b1, w2_bf, b2, w3s, b3s = kernel_params
    n, state_dim = state.shape

    tb, n_pad, num_tiles = _choose_tile(n, block_b)
    # Lane-dense (1, tb) output blocks need tb % 128 == 0 unless tb spans the
    # whole (single-tile) output.
    assert num_tiles == 1 or tb % 128 == 0, (
        "multi-tile runs require a batch tile that is a multiple of 128")

    if n_pad != n:
        state = jnp.pad(state, ((0, n_pad - n), (0, 0)))

    const = lambda arr: pl.BlockSpec(arr.shape, lambda i: (0,) * arr.ndim)

    out_row = pl.pallas_call(
        _value_net_kernel,
        out_shape=jax.ShapeDtypeStruct((1, n_pad), jnp.float32),
        grid=(num_tiles,),
        in_specs=[
            pl.BlockSpec((tb, state_dim), lambda i: (i, 0)),  # streamed state
            const(w1_bf), const(b1),                          # VMEM-resident
            const(w2_bf), const(b2),
            const(w3s), const(b3s),
        ],
        out_specs=pl.BlockSpec((1, tb), lambda i: (0, i)),    # lane-dense out
        compiler_params=pltpu.CompilerParams(
            dimension_semantics=("parallel",),
            vmem_limit_bytes=32 * 1024 * 1024),
    )(state, w1_bf, b1, w2_bf, b2, w3s, b3s)

    # Undo the lane-dense layout: (1, n_pad) row -> (n, 1) column.
    return out_row.reshape(n_pad, 1)[:n]


def init_params(state_dim, key):
    """Deterministic init mirroring the PyTorch module's shapes/quirks.

    fanin_init uses fanin = weight.size(0) = out_features as written; we
    reproduce those bounds.  Biases use nn.Linear's 1/sqrt(in_features).
    Weights are stored as (in, out); fc3's weight is kept as a (1, 256) row.
    """
    k1, k2, k3, k4, k5, k6 = jax.random.split(key, 6)

    v1 = 1.0 / jnp.sqrt(512.0)   # fanin_init bound for fc1.weight (size[0]=512)
    v2 = 1.0 / jnp.sqrt(256.0)   # fanin_init bound for fc2.weight (size[0]=256)

    w1 = jax.random.uniform(k1, (state_dim, 512), jnp.float32, -v1, v1)
    b1 = jax.random.uniform(k2, (1, 512), jnp.float32,
                            -1.0 / jnp.sqrt(state_dim), 1.0 / jnp.sqrt(state_dim))

    w2 = jax.random.uniform(k3, (512, 256), jnp.float32, -v2, v2)
    b2 = jax.random.uniform(k4, (1, 256), jnp.float32,
                            -1.0 / jnp.sqrt(512.0), 1.0 / jnp.sqrt(512.0))

    w3 = jax.random.uniform(k5, (1, 256), jnp.float32, -EPS, EPS)
    b3 = jax.random.uniform(k6, (1, 1), jnp.float32,
                            -1.0 / jnp.sqrt(256.0), 1.0 / jnp.sqrt(256.0))

    return (w1, b1, w2, b2, w3, b3)


def _reference_f32(state, params):
    w1, b1, w2, b2, w3, b3 = params
    h1 = jnp.maximum(state @ w1 + b1, 0.0)
    h2 = jnp.maximum(h1 @ w2 + b2, 0.0)
    v = jnp.sum(h2 * w3, axis=-1, keepdims=True) + b3
    return 10.0 * jnp.tanh(0.001 * v)


def _reference_bf16(state, params):
    # Emulates the kernel's numerics (bf16 fc1/fc2 inputs, f32 accumulation,
    # 0.001 folded into w3/b3).
    w1, b1, w2, b2, w3, b3 = params
    x = state.astype(jnp.bfloat16)
    h1 = jnp.maximum(
        jnp.dot(x, w1.astype(jnp.bfloat16),
                preferred_element_type=jnp.float32) + b1, 0.0)
    h2 = jnp.maximum(
        jnp.dot(h1.astype(jnp.bfloat16), w2.astype(jnp.bfloat16),
                preferred_element_type=jnp.float32) + b2, 0.0)
    v = jnp.sum(h2 * (w3 * 0.001), axis=-1, keepdims=True) + b3 * 0.001
    return 10.0 * jnp.tanh(v)


if __name__ == "__main__":
    state_dim = 32
    key = jax.random.PRNGKey(0)
    k_params, k_s1, k_s2 = jax.random.split(key, 3)
    params = init_params(state_dim, k_params)
    kparams = prepare_params(params)          # one-time bf16 cast + scale fold

    # Small case (batch=2): single padded tile.
    s_small = jax.random.normal(k_s1, (2, state_dim), dtype=jnp.float32)
    out_small = jax.block_until_ready(value_net_forward(s_small, kparams))
    assert out_small.shape == (2, 1)
    assert jnp.allclose(out_small, _reference_bf16(s_small, params),
                        atol=1e-5, rtol=1e-3)
    assert jnp.allclose(out_small, _reference_f32(s_small, params),
                        atol=5e-4, rtol=5e-2)

    # Multi-tile case: exercises the even-tile grid, padding and the
    # lane-dense output path (1040 rows -> 2 tiles of 640).
    s_big = jax.random.normal(k_s2, (1040, state_dim), dtype=jnp.float32)
    out_big = jax.block_until_ready(value_net_forward(s_big, kparams))
    assert out_big.shape == (1040, 1)
    assert jnp.allclose(out_big, _reference_bf16(s_big, params),
                        atol=1e-5, rtol=1e-3)
    assert jnp.allclose(out_big, _reference_f32(s_big, params),
                        atol=5e-4, rtol=5e-2)

    print("KERNEL_OK")
</pallas_src>

<mosaic_0001>
module attributes {stable_mosaic.version = 11 : i64} {
  func.func @_value_net_kernel(%arg0: i32, %arg1: memref<8x32xf32, #tpu.memory_space<vmem>>, %arg2: memref<32x512xbf16, #tpu.memory_space<vmem>>, %arg3: memref<1x512xf32, #tpu.memory_space<vmem>>, %arg4: memref<512x256xbf16, #tpu.memory_space<vmem>>, %arg5: memref<1x256xf32, #tpu.memory_space<vmem>>, %arg6: memref<1x256xf32, #tpu.memory_space<vmem>>, %arg7: memref<1x1xf32, #tpu.memory_space<vmem>>, %arg8: memref<1x8xf32, #tpu.memory_space<vmem>>) attributes {dimension_semantics = [#tpu.dimension_semantics<parallel>], iteration_bounds = array<i64: 1>, scalar_prefetch = 0 : i64, scratch_operands = 0 : i64, tpu.core_type = #tpu.core_type<tc>, window_params = [{transform_indices = @transform_0, window_bounds = array<i64: 8, 32>}, {pipeline_mode = #tpu.pipeline_mode<synchronous>, transform_indices = @transform_1, window_bounds = array<i64: 32, 512>}, {pipeline_mode = #tpu.pipeline_mode<synchronous>, transform_indices = @transform_2, window_bounds = array<i64: 1, 512>}, {pipeline_mode = #tpu.pipeline_mode<synchronous>, transform_indices = @transform_3, window_bounds = array<i64: 512, 256>}, {pipeline_mode = #tpu.pipeline_mode<synchronous>, transform_indices = @transform_4, window_bounds = array<i64: 1, 256>}, {pipeline_mode = #tpu.pipeline_mode<synchronous>, transform_indices = @transform_5, window_bounds = array<i64: 1, 256>}, {pipeline_mode = #tpu.pipeline_mode<synchronous>, transform_indices = @transform_6, window_bounds = array<i64: 1, 1>}, {transform_indices = @transform_7, window_bounds = array<i64: 1, 8>}]} {
    %c0 = arith.constant 0 : index
    %c0_0 = arith.constant 0 : index
    %0 = vector.load %arg1[%c0, %c0_0] : memref<8x32xf32, #tpu.memory_space<vmem>>, vector<8x32xf32>
    %1 = arith.truncf %0 : vector<8x32xf32> to vector<8x32xbf16>
    %c0_1 = arith.constant 0 : index
    %c0_2 = arith.constant 0 : index
    %2 = vector.load %arg2[%c0_1, %c0_2] : memref<32x512xbf16, #tpu.memory_space<vmem>>, vector<32x512xbf16>
    %cst = arith.constant dense<0.000000e+00> : vector<8x512xf32>
    %3 = tpu.matmul %1, %2, %cst {dimension_numbers = #tpu.dot_dimension_numbers<[1], [0], [0], [1], [0, 0, 1, 1], [], []>} : vector<8x32xbf16>, vector<32x512xbf16>, vector<8x512xf32> -> vector<8x512xf32>
    %c0_3 = arith.constant 0 : index
    %c0_4 = arith.constant 0 : index
    %4 = vector.load %arg3[%c0_3, %c0_4] : memref<1x512xf32, #tpu.memory_space<vmem>>, vector<1x512xf32>
    %5 = vector.broadcast %4 : vector<1x512xf32> to vector<8x512xf32>
    %6 = arith.addf %3, %5 : vector<8x512xf32>
    %cst_5 = arith.constant 0.000000e+00 : f32
    %7 = vector.broadcast %cst_5 : f32 to vector<8x512xf32>
    %8 = arith.maximumf %6, %7 : vector<8x512xf32>
    %9 = arith.truncf %8 : vector<8x512xf32> to vector<8x512xbf16>
    %c0_6 = arith.constant 0 : index
    %c0_7 = arith.constant 0 : index
    %10 = vector.load %arg4[%c0_6, %c0_7] : memref<512x256xbf16, #tpu.memory_space<vmem>>, vector<512x256xbf16>
    %cst_8 = arith.constant dense<0.000000e+00> : vector<8x256xf32>
    %11 = tpu.matmul %9, %10, %cst_8 {dimension_numbers = #tpu.dot_dimension_numbers<[1], [0], [0], [1], [0, 0, 1, 1], [], []>} : vector<8x512xbf16>, vector<512x256xbf16>, vector<8x256xf32> -> vector<8x256xf32>
    %c0_9 = arith.constant 0 : index
    %c0_10 = arith.constant 0 : index
    %12 = vector.load %arg5[%c0_9, %c0_10] : memref<1x256xf32, #tpu.memory_space<vmem>>, vector<1x256xf32>
    %13 = vector.broadcast %12 : vector<1x256xf32> to vector<8x256xf32>
    %14 = arith.addf %11, %13 : vector<8x256xf32>
    %cst_11 = arith.constant 0.000000e+00 : f32
    %15 = vector.broadcast %cst_11 : f32 to vector<8x256xf32>
    %16 = arith.maximumf %14, %15 : vector<8x256xf32>
    %c0_12 = arith.constant 0 : index
    %c0_13 = arith.constant 0 : index
    %17 = vector.load %arg6[%c0_12, %c0_13] : memref<1x256xf32, #tpu.memory_space<vmem>>, vector<1x256xf32>
    %18 = vector.broadcast %17 : vector<1x256xf32> to vector<8x256xf32>
    %19 = arith.mulf %16, %18 : vector<8x256xf32>
    %20 = vector.extract_strided_slice %19 {offsets = [0, 0], sizes = [8, 128], strides = [1, 1]} : vector<8x256xf32> to vector<8x128xf32>
    %21 = vector.extract_strided_slice %19 {offsets = [0, 128], sizes = [8, 128], strides = [1, 1]} : vector<8x256xf32> to vector<8x128xf32>
    %22 = arith.addf %20, %21 : vector<8x128xf32>
    %cst_14 = arith.constant dense<0.000000e+00> : vector<8xf32>
    %23 = vector.multi_reduction <add>, %22, %cst_14 [1] : vector<8x128xf32> to vector<8xf32>
    %24 = vector.shape_cast %23 : vector<8xf32> to vector<1x8xf32>
    %c0_15 = arith.constant 0 : index
    %c0_16 = arith.constant 0 : index
    %25 = vector.load %arg7[%c0_15, %c0_16] : memref<1x1xf32, #tpu.memory_space<vmem>>, vector<1x1xf32>
    %26 = vector.broadcast %25 : vector<1x1xf32> to vector<1x8xf32>
    %27 = arith.addf %24, %26 : vector<1x8xf32>
    %28 = math.tanh %27 : vector<1x8xf32>
    %cst_17 = arith.constant 1.000000e+01 : f32
    %29 = vector.broadcast %cst_17 : f32 to vector<1x8xf32>
    %30 = arith.mulf %29, %28 : vector<1x8xf32>
    %c0_18 = arith.constant 0 : index
    %c0_19 = arith.constant 0 : index
    %31 = vector.load %arg8[%c0_18, %c0_19] : memref<1x8xf32, #tpu.memory_space<vmem>>, vector<1x8xf32>
    tpu.vector_store %arg8[%c0_18, %c0_19], %30 {strides = array<i32>} : memref<1x8xf32, #tpu.memory_space<vmem>>, vector<1x8xf32>,
    return
  }
  func.func @transform_0(%arg0: i32) -> (i32, i32) {
    %c0_i32 = arith.constant 0 : i32
    %c0_i32_0 = arith.constant 0 : i32
    return %arg0, %c0_i32 : i32, i32
  }
  func.func @transform_1(%arg0: i32) -> (i32, i32) {
    %c0_i32 = arith.constant 0 : i32
    %c0_i32_0 = arith.constant 0 : i32
    %c0_i32_1 = arith.constant 0 : i32
    return %c0_i32, %c0_i32_0 : i32, i32
  }
  func.func @transform_2(%arg0: i32) -> (i32, i32) {
    %c0_i32 = arith.constant 0 : i32
    %c0_i32_0 = arith.constant 0 : i32
    %c0_i32_1 = arith.constant 0 : i32
    return %c0_i32, %c0_i32_0 : i32, i32
  }
  func.func @transform_3(%arg0: i32) -> (i32, i32) {
    %c0_i32 = arith.constant 0 : i32
    %c0_i32_0 = arith.constant 0 : i32
    %c0_i32_1 = arith.constant 0 : i32
    return %c0_i32, %c0_i32_0 : i32, i32
  }
  func.func @transform_4(%arg0: i32) -> (i32, i32) {
    %c0_i32 = arith.constant 0 : i32
    %c0_i32_0 = arith.constant 0 : i32
    %c0_i32_1 = arith.constant 0 : i32
    return %c0_i32, %c0_i32_0 : i32, i32
  }
  func.func @transform_5(%arg0: i32) -> (i32, i32) {
    %c0_i32 = arith.constant 0 : i32
    %c0_i32_0 = arith.constant 0 : i32
    %c0_i32_1 = arith.constant 0 : i32
    return %c0_i32, %c0_i32_0 : i32, i32
  }
  func.func @transform_6(%arg0: i32) -> (i32, i32) {
    %c0_i32 = arith.constant 0 : i32
    %c0_i32_0 = arith.constant 0 : i32
    %c0_i32_1 = arith.constant 0 : i32
    return %c0_i32, %c0_i32_0 : i32, i32
  }
  func.func @transform_7(%arg0: i32) -> (i32, i32) {
    %c0_i32 = arith.constant 0 : i32
    %c0_i32_0 = arith.constant 0 : i32
    return %c0_i32, %arg0 : i32, i32
  }
}

</mosaic_0001>

<llo_original>
// kernel: value_net_forward.1
$region0: #{value_net_forward.1}
  #allocation0 [shape = 'u32[]', space=smem, size = 0x4, offset = 0x4, fixed_abs, tag = 'smem constant byte address 0x4 - core index']
  #allocation1 [shape = 'u32[144,128]{1,0:T(1,128)}', space=vmem, size = 0x12000, scoped, tag = 'internal scratch']
  #allocation2 [shape = 'f32[1,1]{1,0:T(1,128)S(1)}', space=vmem, size = 0x200, scoped, tag = 'scoped memory for value_net_forward.1']
  %s0 = inlined_call_operand.vmem [shape: f32[8,32], index: 0, kind: input, shape index: {}]
  %s1 = inlined_call_operand.hbm [shape: bf16[32,512], index: 1, kind: input, shape index: {}]
  %s2 = inlined_call_operand.vmem [shape: f32[1,512], index: 2, kind: input, shape index: {}]
  %s3 = inlined_call_operand.hbm [shape: bf16[512,256], index: 3, kind: input, shape index: {}]
  %s4 = inlined_call_operand.vmem [shape: f32[1,256], index: 4, kind: input, shape index: {}]
  %s5 = inlined_call_operand.vmem [shape: f32[1,256], index: 5, kind: input, shape index: {}]
  %s6 = inlined_call_operand.<no memory space> [shape: f32[1,1], index: 6, kind: input, shape index: {}]
  %s7 = inlined_call_operand.vmem [shape: f32[1,8], index: 7, kind: output, shape index: {}]
  %s8 = sld [smem:[#allocation0]]
  $region46: #{value_net_forward.1} parent=0
    _
  %s10 = ssub.s32 1, %s8
  %s11 = scalar_select 0, %s10, %s8
  %v12 = vstv %s6
  %13 = vst [vmem:[#allocation2] sm:$0x1] %v12
  $region1: #{value_net_forward.1} parent=0
    #allocation3 [shape = 'u8[32768]{0}', space=vmem, size = 0x8000, scoped, tag = 'input window, operand 1, single buffered']
    #allocation4 [shape = 's32[1]{0}', space=sflag, size = 0x4, scoped, tag = 'scoped memory for value_net_forward.1']
    #allocation5 [shape = 'u8[262144]{0}', space=vmem, size = 0x40000, scoped, tag = 'input window, operand 3, single buffered']
    #allocation6 [shape = 's32[1]{0}', space=sflag, size = 0x4, scoped, tag = 'scoped memory for value_net_forward.1']
    %14 = vsyncpa [#allocation4], 0
    %15 = vsyncpa [#allocation6], 0
    // Predicated region
    $region2: #{value_net_forward.1} parent=1 // pred_check
      _
    $region3: #{value_net_forward.1} parent=1 // pred_check_branch
      %17 = sbr.rel (0) target = $region5
    $region4: #{value_net_forward.1} parent=1 // pred_region
      _
    $region5: #{value_net_forward.1} parent=1 // pred_fallthru
      _
    // Predicated region
    $region6: #{value_net_forward.1} parent=1 // pred_check
      _
    $region7: #{value_net_forward.1} parent=1 // pred_check_branch
      %19 = sbr.rel (0) target = $region9
    $region8: #{value_net_forward.1} parent=1 // pred_region
      %s21 = ssub.s32 1024, 1024
      %22 = vsyncadd [#allocation4], %s21
      %s23 = sshll.u32 [#allocation3], 4
      %s24 = int_to_ptr.vmem [resolvable:$true] %s23
      %29 = dma.hbm_to_vmem [thread:$0]  %s1, 1024, %s24, [#allocation4], 256, 256, 16
    $region9: #{value_net_forward.1} parent=1 // pred_fallthru
      _
    // Predicated region
    $region10: #{value_net_forward.1} parent=1 // pred_check
      _
    $region11: #{value_net_forward.1} parent=1 // pred_check_branch
      %31 = sbr.rel (0) target = $region13
    $region12: #{value_net_forward.1} parent=1 // pred_region
      _
    $region13: #{value_net_forward.1} parent=1 // pred_fallthru
      _
    // Predicated region
    $region14: #{value_net_forward.1} parent=1 // pred_check
      _
    $region15: #{value_net_forward.1} parent=1 // pred_check_branch
      %33 = sbr.rel (0) target = $region17
    $region16: #{value_net_forward.1} parent=1 // pred_region
      %s35 = ssub.s32 8192, 8192
      %36 = vsyncadd [#allocation6], %s35
      %s37 = sshll.u32 [#allocation5], 4
      %s38 = int_to_ptr.vmem [resolvable:$true] %s37
      %43 = dma.hbm_to_vmem [thread:$0]  %s3, 8192, %s38, [#allocation6], 128, 128, 8
    $region17: #{value_net_forward.1} parent=1 // pred_fallthru
      _
    // Predicated region
    $region18: #{value_net_forward.1} parent=1 // pred_check
      _
    $region19: #{value_net_forward.1} parent=1 // pred_check_branch
      %45 = sbr.rel (0) target = $region21
    $region20: #{value_net_forward.1} parent=1 // pred_region
      _
    $region21: #{value_net_forward.1} parent=1 // pred_fallthru
      _
    // Predicated region
    $region22: #{value_net_forward.1} parent=1 // pred_check
      _
    $region23: #{value_net_forward.1} parent=1 // pred_check_branch
      %47 = sbr.rel (0) target = $region25
    $region24: #{value_net_forward.1} parent=1 // pred_region
      _
    $region25: #{value_net_forward.1} parent=1 // pred_fallthru
      _
    // Predicated region
    $region26: #{value_net_forward.1} parent=1 // pred_check
      _
    $region27: #{value_net_forward.1} parent=1 // pred_check_branch
      %49 = sbr.rel (0) target = $region29
    $region28: #{value_net_forward.1} parent=1 // pred_region
      _
    $region29: #{value_net_forward.1} parent=1 // pred_fallthru
      _
    // Predicated region
    $region30: #{value_net_forward.1} parent=1 // pred_check
      _
    $region31: #{value_net_forward.1} parent=1 // pred_check_branch
      %51 = sbr.rel (0) target = $region33
    $region32: #{value_net_forward.1} parent=1 // pred_region
      %52 = dma.done [#allocation4], 1024
    $region33: #{value_net_forward.1} parent=1 // pred_fallthru
      _
    // Predicated region
    $region34: #{value_net_forward.1} parent=1 // pred_check
      _
    $region35: #{value_net_forward.1} parent=1 // pred_check_branch
      %54 = sbr.rel (0) target = $region37
    $region36: #{value_net_forward.1} parent=1 // pred_region
      %55 = dma.done [#allocation6], 8192
    $region37: #{value_net_forward.1} parent=1 // pred_fallthru
      _
    %v57 = vld [vmem:[%s0] sm:$0xff]
    %v58 = vpack.c.bf16 %v57, %v57
    %v59 = vld [vmem:[#allocation3] sm:$0xff]
    %v60 = vld [vmem:[#allocation3 + $0x8] sm:$0xff]
    %v61 = vld [vmem:[#allocation3 + $0x10] sm:$0xff]
    %v62 = vld [vmem:[#allocation3 + $0x18] sm:$0xff]
    %v63 = vld [vmem:[#allocation3 + $0x20] sm:$0xff]
    %v64 = vld [vmem:[#allocation3 + $0x28] sm:$0xff]
    %v65 = vld [vmem:[#allocation3 + $0x30] sm:$0xff]
    %v66 = vld [vmem:[#allocation3 + $0x38] sm:$0xff]
    %v67 = vld [vmem:[%s2] sm:$0xf]
    %v69 = vlaneseq
    %v70 = vshrl.u32 %v69, 7
    %v71 = vsub.s32 0, %v70
    %v72 = vrot.slane %v67, %v71
    %v73 = vlaneseq
    %v74 = vshrl.u32 %v73, 7
    %v75 = vsub.s32 1, %v74
    %v76 = vrot.slane %v67, %v75
    %v77 = vlaneseq
    %v78 = vshrl.u32 %v77, 7
    %v79 = vsub.s32 2, %v78
    %v80 = vrot.slane %v67, %v79
    %v81 = vlaneseq
    %v82 = vshrl.u32 %v81, 7
    %v83 = vsub.s32 3, %v82
    %v84 = vrot.slane %v67, %v83
    %v97 = vunpack.c.l.b16 %v59
    %v98 = vunpack.c.h.b16 %v59
    %v99 = vunpack.c.l.b16 %v60
    %v100 = vunpack.c.h.b16 %v60
    %v101 = vunpack.c.l.b16 %v61
    %v102 = vunpack.c.h.b16 %v61
    %v103 = vunpack.c.l.b16 %v62
    %v104 = vunpack.c.h.b16 %v62
    %v105 = vunpack.c.l.b16 %v63
    %v106 = vunpack.c.h.b16 %v63
    %v107 = vunpack.c.l.b16 %v64
    %v108 = vunpack.c.h.b16 %v64
    %v109 = vunpack.c.l.b16 %v65
    %v110 = vunpack.c.h.b16 %v65
    %v111 = vunpack.c.l.b16 %v66
    %v112 = vunpack.c.h.b16 %v66
    %v113 = vpack.c.b16 %v101, %v97
    %v114 = vpack.c.b16 %v102, %v98
    %v115 = vpack.c.b16 %v103, %v99
    %v116 = vpack.c.b16 %v104, %v100
    %v117 = vpack.c.b16 %v109, %v105
    %v118 = vpack.c.b16 %v110, %v106
    %v119 = vpack.c.b16 %v111, %v107
    %v120 = vpack.c.b16 %v112, %v108
    %vm129 = vcmask 261120
    %v131 = vsel %vm129, %v58, 0
    %133 = vmatprep.subr.bf16.mxu0 %v114
    %134 = vmatpush1.bf16.msra.mxu0 %v113
    %135 = vmatprep.subr.bf16.mxu0 %v118
    %136 = vmatpush1.bf16.msra.mxu0 %v117
    %137 = vmatprep.subr.bf16.mxu0 0
    %138 = vmatpush1.bf16.msra.mxu0 0
    %139 = vmatprep.subr.bf16.mxu0 0
    %140 = vmatpush1.bf16.msra.mxu0 0
    %141 = vmatprep.subr.bf16.mxu0 0
    %142 = vmatpush1.bf16.msra.mxu0 0
    %143 = vmatprep.subr.bf16.mxu0 0
    %144 = vmatpush1.bf16.msra.mxu0 0
    %145 = vmatprep.subr.bf16.mxu0 0
    %146 = vmatpush1.bf16.msra.mxu0 0
    %147 = vmatprep.subr.bf16.mxu0 0
    %148 = vmatpush1.bf16.msra.mxu0 0
    %149 = vmatprep.subr.bf16.mxu0 0
    %150 = vmatpush1.bf16.msra.mxu0 0
    %151 = vmatprep.subr.bf16.mxu0 0
    %152 = vmatpush1.bf16.msra.mxu0 0
    %153 = vmatprep.subr.bf16.mxu0 0
    %154 = vmatpush1.bf16.msra.mxu0 0
    %155 = vmatprep.subr.bf16.mxu0 0
    %156 = vmatpush1.bf16.msra.mxu0 0
    %157 = vmatprep.subr.bf16.mxu0 0
    %158 = vmatpush1.bf16.msra.mxu0 0
    %159 = vmatprep.subr.bf16.mxu0 0
    %160 = vmatpush1.bf16.msra.mxu0 0
    %161 = vmatprep.subr.bf16.mxu0 0
    %162 = vmatpush1.bf16.msra.mxu0 0
    %163 = vmatprep.subr.bf16.mxu0 0
    %164 = vmatpush1.bf16.msra.mxu0 0
    %165 = vmatprep.mubr.bf16.mxu0 0
    %166 = vmatmul.mubr.bf16.gmra.mrb[0].mxu0 %v131
    %v167 = vpop.f32.mrb[0].mxu0
    %v168 = vadd.f32 %v72, %v167
    %v169 = vpop.f32.mrb[0].mxu0
    %v170 = vadd.f32 %v76, %v169
    %v171 = vpop.f32.mrb[0].mxu0
    %v172 = vpop.f32.mrb[0].mxu0
    %173 = vdwg.mxu0
    %174 = vmatprep.subr.bf16.mxu0 %v116
    %175 = vmatpush1.bf16.msra.mxu0 %v115
    %176 = vmatprep.subr.bf16.mxu0 %v120
    %177 = vmatpush1.bf16.msra.mxu0 %v119
    %178 = vmatprep.subr.bf16.mxu0 0
    %179 = vmatpush1.bf16.msra.mxu0 0
    %180 = vmatprep.subr.bf16.mxu0 0
    %181 = vmatpush1.bf16.msra.mxu0 0
    %182 = vmatprep.subr.bf16.mxu0 0
    %183 = vmatpush1.bf16.msra.mxu0 0
    %184 = vmatprep.subr.bf16.mxu0 0
    %185 = vmatpush1.bf16.msra.mxu0 0
    %186 = vmatprep.subr.bf16.mxu0 0
    %187 = vmatpush1.bf16.msra.mxu0 0
    %188 = vmatprep.subr.bf16.mxu0 0
    %189 = vmatpush1.bf16.msra.mxu0 0
    %190 = vmatprep.subr.bf16.mxu0 0
    %191 = vmatpush1.bf16.msra.mxu0 0
    %192 = vmatprep.subr.bf16.mxu0 0
    %193 = vmatpush1.bf16.msra.mxu0 0
    %194 = vmatprep.subr.bf16.mxu0 0
    %195 = vmatpush1.bf16.msra.mxu0 0
    %196 = vmatprep.subr.bf16.mxu0 0
    %197 = vmatpush1.bf16.msra.mxu0 0
    %198 = vmatprep.subr.bf16.mxu0 0
    %199 = vmatpush1.bf16.msra.mxu0 0
    %200 = vmatprep.subr.bf16.mxu0 0
    %201 = vmatpush1.bf16.msra.mxu0 0
    %202 = vmatprep.subr.bf16.mxu0 0
    %203 = vmatpush1.bf16.msra.mxu0 0
    %204 = vmatprep.subr.bf16.mxu0 0
    %205 = vmatpush1.bf16.msra.mxu0 0
    %206 = vmatprep.mubr.bf16.mxu0 0
    %207 = vmatmul.mubr.bf16.gmra.mrb[0].mxu0 %v131
    %v208 = vpop.f32.mrb[0].mxu0
    %v209 = vadd.f32 %v80, %v208
    %v210 = vpop.f32.mrb[0].mxu0
    %v211 = vadd.f32 %v84, %v210
    %v212 = vpop.f32.mrb[0].mxu0
    %v213 = vpop.f32.mrb[0].mxu0
    %214 = vdwg.mxu0
    %v215 = vmax.f32 %v168, 0.0
    %v216 = vmax.f32 %v170, 0.0
    %v217 = vmax.f32 %v209, 0.0
    %v218 = vmax.f32 %v211, 0.0
    %v219 = vpack.c.bf16 %v215, %v215
    %v220 = vpack.c.bf16 %v216, %v216
    %v221 = vpack.c.bf16 %v217, %v217
    %v222 = vpack.c.bf16 %v218, %v218
    %v223 = vld [vmem:[#allocation5] sm:$0xff]
    %v224 = vld [vmem:[#allocation5 + $0x8] sm:$0xff]
    %v225 = vld [vmem:[#allocation5 + $0x10] sm:$0xff]
    %v226 = vld [vmem:[#allocation5 + $0x18] sm:$0xff]
    %v227 = vld [vmem:[#allocation5 + $0x20] sm:$0xff]
    %v228 = vld [vmem:[#allocation5 + $0x28] sm:$0xff]
    %v229 = vld [vmem:[#allocation5 + $0x30] sm:$0xff]
    %v230 = vld [vmem:[#allocation5 + $0x38] sm:$0xff]
    %v231 = vld [vmem:[#allocation5 + $0x40] sm:$0xff]
    %v232 = vld [vmem:[#allocation5 + $0x48] sm:$0xff]
    %v233 = vld [vmem:[#allocation5 + $0x50] sm:$0xff]
    %v234 = vld [vmem:[#allocation5 + $0x58] sm:$0xff]
    %v235 = vld [vmem:[#allocation5 + $0x60] sm:$0xff]
    %v236 = vld [vmem:[#allocation5 + $0x68] sm:$0xff]
    %v237 = vld [vmem:[#allocation5 + $0x70] sm:$0xff]
    %v238 = vld [vmem:[#allocation5 + $0x78] sm:$0xff]
    %v239 = vld [vmem:[#allocation5 + $0x80] sm:$0xff]
    %v240 = vld [vmem:[#allocation5 + $0x88] sm:$0xff]
    %v241 = vld [vmem:[#allocation5 + $0x90] sm:$0xff]
    %v242 = vld [vmem:[#allocation5 + $0x98] sm:$0xff]
    %v243 = vld [vmem:[#allocation5 + $0xa0] sm:$0xff]
    %v244 = vld [vmem:[#allocation5 + $0xa8] sm:$0xff]
    %v245 = vld [vmem:[#allocation5 + $0xb0] sm:$0xff]
    %v246 = vld [vmem:[#allocation5 + $0xb8] sm:$0xff]
    %v247 = vld [vmem:[#allocation5 + $0xc0] sm:$0xff]
    %v248 = vld [vmem:[#allocation5 + $0xc8] sm:$0xff]
    %v249 = vld [vmem:[#allocation5 + $0xd0] sm:$0xff]
    %v250 = vld [vmem:[#allocation5 + $0xd8] sm:$0xff]
    %v251 = vld [vmem:[#allocation5 + $0xe0] sm:$0xff]
    %v252 = vld [vmem:[#allocation5 + $0xe8] sm:$0xff]
    %v253 = vld [vmem:[#allocation5 + $0xf0] sm:$0xff]
    %v254 = vld [vmem:[#allocation5 + $0xf8] sm:$0xff]
    %v255 = vld [vmem:[#allocation5 + $0x100] sm:$0xff]
    %v256 = vld [vmem:[#allocation5 + $0x108] sm:$0xff]
    %v257 = vld [vmem:[#allocation5 + $0x110] sm:$0xff]
    %v258 = vld [vmem:[#allocation5 + $0x118] sm:$0xff]
    %v259 = vld [vmem:[#allocation5 + $0x120] sm:$0xff]
    %v260 = vld [vmem:[#allocation5 + $0x128] sm:$0xff]
    %v261 = vld [vmem:[#allocation5 + $0x130] sm:$0xff]
    %v262 = vld [vmem:[#allocation5 + $0x138] sm:$0xff]
    %v263 = vld [vmem:[#allocation5 + $0x140] sm:$0xff]
    %v264 = vld [vmem:[#allocation5 + $0x148] sm:$0xff]
    %v265 = vld [vmem:[#allocation5 + $0x150] sm:$0xff]
    %v266 = vld [vmem:[#allocation5 + $0x158] sm:$0xff]
    %v267 = vld [vmem:[#allocation5 + $0x160] sm:$0xff]
    %v268 = vld [vmem:[#allocation5 + $0x168] sm:$0xff]
    %v269 = vld [vmem:[#allocation5 + $0x170] sm:$0xff]
    %v270 = vld [vmem:[#allocation5 + $0x178] sm:$0xff]
    %v271 = vld [vmem:[#allocation5 + $0x180] sm:$0xff]
    %v272 = vld [vmem:[#allocation5 + $0x188] sm:$0xff]
    %v273 = vld [vmem:[#allocation5 + $0x190] sm:$0xff]
    %v274 = vld [vmem:[#allocation5 + $0x198] sm:$0xff]
    %v275 = vld [vmem:[#allocation5 + $0x1a0] sm:$0xff]
    %v276 = vld [vmem:[#allocation5 + $0x1a8] sm:$0xff]
    %v277 = vld [vmem:[#allocation5 + $0x1b0] sm:$0xff]
    %v278 = vld [vmem:[#allocation5 + $0x1b8] sm:$0xff]
    %v279 = vld [vmem:[#allocation5 + $0x1c0] sm:$0xff]
    %v280 = vld [vmem:[#allocation5 + $0x1c8] sm:$0xff]
    %v281 = vld [vmem:[#allocation5 + $0x1d0] sm:$0xff]
    %v282 = vld [vmem:[#allocation5 + $0x1d8] sm:$0xff]
    %v283 = vld [vmem:[#allocation5 + $0x1e0] sm:$0xff]
    %v284 = vld [vmem:[#allocation5 + $0x1e8] sm:$0xff]
    %v285 = vld [vmem:[#allocation5 + $0x1f0] sm:$0xff]
    %v286 = vld [vmem:[#allocation5 + $0x1f8] sm:$0xff]
    %v287 = vld [vmem:[%s4] sm:$0x3]
    %v289 = vlaneseq
    %v290 = vshrl.u32 %v289, 7
    %v291 = vsub.s32 0, %v290
    %v292 = vrot.slane %v287, %v291
    %v293 = vlaneseq
    %v294 = vshrl.u32 %v293, 7
    %v295 = vsub.s32 1, %v294
    %v296 = vrot.slane %v287, %v295
    %v363 = vunpack.c.l.b16 %v223
    %v364 = vunpack.c.h.b16 %v223
    %v365 = vunpack.c.l.b16 %v224
    %v366 = vunpack.c.h.b16 %v224
    %v367 = vunpack.c.l.b16 %v225
    %v368 = vunpack.c.h.b16 %v225
    %v369 = vunpack.c.l.b16 %v226
    %v370 = vunpack.c.h.b16 %v226
    %v371 = vunpack.c.l.b16 %v227
    %v372 = vunpack.c.h.b16 %v227
    %v373 = vunpack.c.l.b16 %v228
    %v374 = vunpack.c.h.b16 %v228
    %v375 = vunpack.c.l.b16 %v229
    %v376 = vunpack.c.h.b16 %v229
    %v377 = vunpack.c.l.b16 %v230
    %v378 = vunpack.c.h.b16 %v230
    %v379 = vunpack.c.l.b16 %v231
    %v380 = vunpack.c.h.b16 %v231
    %v381 = vunpack.c.l.b16 %v232
    %v382 = vunpack.c.h.b16 %v232
    %v383 = vunpack.c.l.b16 %v233
    %v384 = vunpack.c.h.b16 %v233
    %v385 = vunpack.c.l.b16 %v234
    %v386 = vunpack.c.h.b16 %v234
    %v387 = vunpack.c.l.b16 %v235
    %v388 = vunpack.c.h.b16 %v235
    %v389 = vunpack.c.l.b16 %v236
    %v390 = vunpack.c.h.b16 %v236
    %v391 = vunpack.c.l.b16 %v237
    %v392 = vunpack.c.h.b16 %v237
    %v393 = vunpack.c.l.b16 %v238
    %v394 = vunpack.c.h.b16 %v238
    %v395 = vunpack.c.l.b16 %v239
    %v396 = vunpack.c.h.b16 %v239
    %v397 = vunpack.c.l.b16 %v240
    %v398 = vunpack.c.h.b16 %v240
    %v399 = vunpack.c.l.b16 %v241
    %v400 = vunpack.c.h.b16 %v241
    %v401 = vunpack.c.l.b16 %v242
    %v402 = vunpack.c.h.b16 %v242
    %v403 = vunpack.c.l.b16 %v243
    %v404 = vunpack.c.h.b16 %v243
    %v405 = vunpack.c.l.b16 %v244
    %v406 = vunpack.c.h.b16 %v244
    %v407 = vunpack.c.l.b16 %v245
    %v408 = vunpack.c.h.b16 %v245
    %v409 = vunpack.c.l.b16 %v246
    %v410 = vunpack.c.h.b16 %v246
    %v411 = vunpack.c.l.b16 %v247
    %v412 = vunpack.c.h.b16 %v247
    %v413 = vunpack.c.l.b16 %v248
    %v414 = vunpack.c.h.b16 %v248
    %v415 = vunpack.c.l.b16 %v249
    %v416 = vunpack.c.h.b16 %v249
    %v417 = vunpack.c.l.b16 %v250
    %v418 = vunpack.c.h.b16 %v250
    %v419 = vunpack.c.l.b16 %v251
    %v420 = vunpack.c.h.b16 %v251
    %v421 = vunpack.c.l.b16 %v252
    %v422 = vunpack.c.h.b16 %v252
    %v423 = vunpack.c.l.b16 %v253
    %v424 = vunpack.c.h.b16 %v253
    %v425 = vunpack.c.l.b16 %v254
    %v426 = vunpack.c.h.b16 %v254
    %v427 = vunpack.c.l.b16 %v255
    %v428 = vunpack.c.h.b16 %v255
    %v429 = vunpack.c.l.b16 %v256
    %v430 = vunpack.c.h.b16 %v256
    %v431 = vunpack.c.l.b16 %v257
    %v432 = vunpack.c.h.b16 %v257
    %v433 = vunpack.c.l.b16 %v258
    %v434 = vunpack.c.h.b16 %v258
    %v435 = vunpack.c.l.b16 %v259
    %v436 = vunpack.c.h.b16 %v259
    %v437 = vunpack.c.l.b16 %v260
    %v438 = vunpack.c.h.b16 %v260
    %v439 = vunpack.c.l.b16 %v261
    %v440 = vunpack.c.h.b16 %v261
    %v441 = vunpack.c.l.b16 %v262
    %v442 = vunpack.c.h.b16 %v262
    %v443 = vunpack.c.l.b16 %v263
    %v444 = vunpack.c.h.b16 %v263
    %v445 = vunpack.c.l.b16 %v264
    %v446 = vunpack.c.h.b16 %v264
    %v447 = vunpack.c.l.b16 %v265
    %v448 = vunpack.c.h.b16 %v265
    %v449 = vunpack.c.l.b16 %v266
    %v450 = vunpack.c.h.b16 %v266
    %v451 = vunpack.c.l.b16 %v267
    %v452 = vunpack.c.h.b16 %v267
    %v453 = vunpack.c.l.b16 %v268
    %v454 = vunpack.c.h.b16 %v268
    %v455 = vunpack.c.l.b16 %v269
    %v456 = vunpack.c.h.b16 %v269
    %v457 = vunpack.c.l.b16 %v270
    %v458 = vunpack.c.h.b16 %v270
    %v459 = vunpack.c.l.b16 %v271
    %v460 = vunpack.c.h.b16 %v271
    %v461 = vunpack.c.l.b16 %v272
    %v462 = vunpack.c.h.b16 %v272
    %v463 = vunpack.c.l.b16 %v273
    %v464 = vunpack.c.h.b16 %v273
    %v465 = vunpack.c.l.b16 %v274
    %v466 = vunpack.c.h.b16 %v274
    %v467 = vunpack.c.l.b16 %v275
    %v468 = vunpack.c.h.b16 %v275
    %v469 = vunpack.c.l.b16 %v276
    %v470 = vunpack.c.h.b16 %v276
    %v471 = vunpack.c.l.b16 %v277
    %v472 = vunpack.c.h.b16 %v277
    %v473 = vunpack.c.l.b16 %v278
    %v474 = vunpack.c.h.b16 %v278
    %v475 = vunpack.c.l.b16 %v279
    %v476 = vunpack.c.h.b16 %v279
    %v477 = vunpack.c.l.b16 %v280
    %v478 = vunpack.c.h.b16 %v280
    %v479 = vunpack.c.l.b16 %v281
    %v480 = vunpack.c.h.b16 %v281
    %v481 = vunpack.c.l.b16 %v282
    %v482 = vunpack.c.h.b16 %v282
    %v483 = vunpack.c.l.b16 %v283
    %v484 = vunpack.c.h.b16 %v283
    %v485 = vunpack.c.l.b16 %v284
    %v486 = vunpack.c.h.b16 %v284
    %v487 = vunpack.c.l.b16 %v285
    %v488 = vunpack.c.h.b16 %v285
    %v489 = vunpack.c.l.b16 %v286
    %v490 = vunpack.c.h.b16 %v286
    %v491 = vpack.c.b16 %v365, %v363
    %v492 = vpack.c.b16 %v366, %v364
    %v493 = vpack.c.b16 %v369, %v367
    %v494 = vpack.c.b16 %v370, %v368
    %v495 = vpack.c.b16 %v373, %v371
    %v496 = vpack.c.b16 %v374, %v372
    %v497 = vpack.c.b16 %v377, %v375
    %v498 = vpack.c.b16 %v378, %v376
    %v499 = vpack.c.b16 %v381, %v379
    %v500 = vpack.c.b16 %v382, %v380
    %v501 = vpack.c.b16 %v385, %v383
    %v502 = vpack.c.b16 %v386, %v384
    %v503 = vpack.c.b16 %v389, %v387
    %v504 = vpack.c.b16 %v390, %v388
    %v505 = vpack.c.b16 %v393, %v391
    %v506 = vpack.c.b16 %v394, %v392
    %v507 = vpack.c.b16 %v397, %v395
    %v508 = vpack.c.b16 %v398, %v396
    %v509 = vpack.c.b16 %v401, %v399
    %v510 = vpack.c.b16 %v402, %v400
    %v511 = vpack.c.b16 %v405, %v403
    %v512 = vpack.c.b16 %v406, %v404
    %v513 = vpack.c.b16 %v409, %v407
    %v514 = vpack.c.b16 %v410, %v408
    %v515 = vpack.c.b16 %v413, %v411
    %v516 = vpack.c.b16 %v414, %v412
    %v517 = vpack.c.b16 %v417, %v415
    %v518 = vpack.c.b16 %v418, %v416
    %v519 = vpack.c.b16 %v421, %v419
    %v520 = vpack.c.b16 %v422, %v420
    %v521 = vpack.c.b16 %v425, %v423
    %v522 = vpack.c.b16 %v426, %v424
    %v523 = vpack.c.b16 %v429, %v427
    %v524 = vpack.c.b16 %v430, %v428
    %v525 = vpack.c.b16 %v433, %v431
    %v526 = vpack.c.b16 %v434, %v432
    %v527 = vpack.c.b16 %v437, %v435
    %v528 = vpack.c.b16 %v438, %v436
    %v529 = vpack.c.b16 %v441, %v439
    %v530 = vpack.c.b16 %v442, %v440
    %v531 = vpack.c.b16 %v445, %v443
    %v532 = vpack.c.b16 %v446, %v444
    %v533 = vpack.c.b16 %v449, %v447
    %v534 = vpack.c.b16 %v450, %v448
    %v535 = vpack.c.b16 %v453, %v451
    %v536 = vpack.c.b16 %v454, %v452
    %v537 = vpack.c.b16 %v457, %v455
    %v538 = vpack.c.b16 %v458, %v456
    %v539 = vpack.c.b16 %v461, %v459
    %v540 = vpack.c.b16 %v462, %v460
    %v541 = vpack.c.b16 %v465, %v463
    %v542 = vpack.c.b16 %v466, %v464
    %v543 = vpack.c.b16 %v469, %v467
    %v544 = vpack.c.b16 %v470, %v468
    %v545 = vpack.c.b16 %v473, %v471
    %v546 = vpack.c.b16 %v474, %v472
    %v547 = vpack.c.b16 %v477, %v475
    %v548 = vpack.c.b16 %v478, %v476
    %v549 = vpack.c.b16 %v481, %v479
    %v550 = vpack.c.b16 %v482, %v480
    %v551 = vpack.c.b16 %v485, %v483
    %v552 = vpack.c.b16 %v486, %v484
    %v553 = vpack.c.b16 %v489, %v487
    %v554 = vpack.c.b16 %v490, %v488
    %619 = vmatprep.subr.bf16.mxu0 %v492
    %620 = vmatpush1.bf16.msra.mxu0 %v491
    %621 = vmatprep.subr.bf16.mxu0 %v494
    %622 = vmatpush1.bf16.msra.mxu0 %v493
    %623 = vmatprep.subr.bf16.mxu0 %v496
    %624 = vmatpush1.bf16.msra.mxu0 %v495
    %625 = vmatprep.subr.bf16.mxu0 %v498
    %626 = vmatpush1.bf16.msra.mxu0 %v497
    %627 = vmatprep.subr.bf16.mxu0 %v500
    %628 = vmatpush1.bf16.msra.mxu0 %v499
    %629 = vmatprep.subr.bf16.mxu0 %v502
    %630 = vmatpush1.bf16.msra.mxu0 %v501
    %631 = vmatprep.subr.bf16.mxu0 %v504
    %632 = vmatpush1.bf16.msra.mxu0 %v503
    %633 = vmatprep.subr.bf16.mxu0 %v506
    %634 = vmatpush1.bf16.msra.mxu0 %v505
    %635 = vmatprep.subr.bf16.mxu0 %v508
    %636 = vmatpush1.bf16.msra.mxu0 %v507
    %637 = vmatprep.subr.bf16.mxu0 %v510
    %638 = vmatpush1.bf16.msra.mxu0 %v509
    %639 = vmatprep.subr.bf16.mxu0 %v512
    %640 = vmatpush1.bf16.msra.mxu0 %v511
    %641 = vmatprep.subr.bf16.mxu0 %v514
    %642 = vmatpush1.bf16.msra.mxu0 %v513
    %643 = vmatprep.subr.bf16.mxu0 %v516
    %644 = vmatpush1.bf16.msra.mxu0 %v515
    %645 = vmatprep.subr.bf16.mxu0 %v518
    %646 = vmatpush1.bf16.msra.mxu0 %v517
    %647 = vmatprep.subr.bf16.mxu0 %v520
    %648 = vmatpush1.bf16.msra.mxu0 %v519
    %649 = vmatprep.subr.bf16.mxu0 %v522
    %650 = vmatpush1.bf16.msra.mxu0 %v521
    %651 = vmatprep.mubr.bf16.mxu0 %v220
    %652 = vmatmul.mubr.bf16.gmra.mrb[0].mxu0 %v219
    %v653 = vpop.f32.mrb[0].mxu0
    %v654 = vadd.f32 %v292, %v653
    %v655 = vpop.f32.mrb[0].mxu0
    %v656 = vadd.f32 %v296, %v655
    %v657 = vpop.f32.mrb[0].mxu0
    %v658 = vpop.f32.mrb[0].mxu0
    %659 = vdwg.mxu0
    %660 = vmatprep.subr.bf16.mxu0 %v524
    %661 = vmatpush1.bf16.msra.mxu0 %v523
    %662 = vmatprep.subr.bf16.mxu0 %v526
    %663 = vmatpush1.bf16.msra.mxu0 %v525
    %664 = vmatprep.subr.bf16.mxu0 %v528
    %665 = vmatpush1.bf16.msra.mxu0 %v527
    %666 = vmatprep.subr.bf16.mxu0 %v530
    %667 = vmatpush1.bf16.msra.mxu0 %v529
    %668 = vmatprep.subr.bf16.mxu0 %v532
    %669 = vmatpush1.bf16.msra.mxu0 %v531
    %670 = vmatprep.subr.bf16.mxu0 %v534
    %671 = vmatpush1.bf16.msra.mxu0 %v533
    %672 = vmatprep.subr.bf16.mxu0 %v536
    %673 = vmatpush1.bf16.msra.mxu0 %v535
    %674 = vmatprep.subr.bf16.mxu0 %v538
    %675 = vmatpush1.bf16.msra.mxu0 %v537
    %676 = vmatprep.subr.bf16.mxu0 %v540
    %677 = vmatpush1.bf16.msra.mxu0 %v539
    %678 = vmatprep.subr.bf16.mxu0 %v542
    %679 = vmatpush1.bf16.msra.mxu0 %v541
    %680 = vmatprep.subr.bf16.mxu0 %v544
    %681 = vmatpush1.bf16.msra.mxu0 %v543
    %682 = vmatprep.subr.bf16.mxu0 %v546
    %683 = vmatpush1.bf16.msra.mxu0 %v545
    %684 = vmatprep.subr.bf16.mxu0 %v548
    %685 = vmatpush1.bf16.msra.mxu0 %v547
    %686 = vmatprep.subr.bf16.mxu0 %v550
    %687 = vmatpush1.bf16.msra.mxu0 %v549
    %688 = vmatprep.subr.bf16.mxu0 %v552
    %689 = vmatpush1.bf16.msra.mxu0 %v551
    %690 = vmatprep.subr.bf16.mxu0 %v554
    %691 = vmatpush1.bf16.msra.mxu0 %v553
    %692 = vmatprep.mubr.bf16.mxu0 %v222
    %693 = vmatmul.mubr.bf16.gmra.mrb[0].mxu0 %v221
    %v694 = vpop.f32.mrb[0].mxu0
    %v695 = vadd.f32 %v654, %v694
    %v696 = vpop.f32.mrb[0].mxu0
    %v697 = vadd.f32 %v656, %v696
    %v698 = vpop.f32.mrb[0].mxu0
    %v699 = vpop.f32.mrb[0].mxu0
    %700 = vdwg.mxu0
    %v701 = vmax.f32 %v695, 0.0
    %v702 = vmax.f32 %v697, 0.0
    %v703 = vld [vmem:[%s5] sm:$0x3]
    %v705 = vlaneseq
    %v706 = vshrl.u32 %v705, 7
    %v707 = vsub.s32 0, %v706
    %v708 = vrot.slane %v703, %v707
    %v709 = vlaneseq
    %v710 = vshrl.u32 %v709, 7
    %v711 = vsub.s32 1, %v710
    %v712 = vrot.slane %v703, %v711
    %v715 = vmul.f32 %v701, %v708
    %v716 = vmul.f32 %v702, %v712
    %v717 = vadd.f32 %v715, %v716
    %718 = vadd.xlane.f32.xlu0 %v717
    %v719 = vpop.xlane.xlu0 %718
    %v720 = vld [vmem:[#allocation2] sm:$0x1]
    %722 = vset.pattern.permute.xlu0 0
    %723 = vperm.xlu0 %722, %v720
    %v724 = vpop.permute.xlu0 %723
    %v726 = vlaneseq
    %v727 = vshrl.u32 %v726, 7
    %v728 = vsub.s32 0, %v727
    %v729 = vrot.slane %v724, %v728
    %v730 = vadd.f32 %v719, %v729
    %v731 = vtanh.pop %v730
    %v732 = vmul.f32 %v731, 10.0
    %v734 = vlaneseq
    %v735 = vand.u32 %v734, 127
    %v736 = vlaneseq
    %v737 = vshrl.u32 %v736, 7
    %v738 = vsub.s32 %v735, %v737
    %v739 = vrot.slane %v732, %v738
    %vm741 = vcmask 57344
    %742 = vst.msk [vmem:[%s7] sm:$0x1] %vm741, %v739
    // Predicated region
    $region38: #{value_net_forward.1} parent=1 // pred_check
      _
    $region39: #{value_net_forward.1} parent=1 // pred_check_branch
      %744 = sbr.rel (0) target = $region41
    $region40: #{value_net_forward.1} parent=1 // pred_region
      _
    $region41: #{value_net_forward.1} parent=1 // pred_fallthru
      _
    // Predicated region
    $region42: #{value_net_forward.1} parent=1 // pred_check
      _
    $region43: #{value_net_forward.1} parent=1 // pred_check_branch
      %746 = sbr.rel (0) target = $region45
    $region44: #{value_net_forward.1} parent=1 // pred_region
      _
    $region45: #{value_net_forward.1} parent=1 // pred_fallthru
      _
    %747 = vsyncpa [#allocation4], 1
    %748 = vsyncpa [#allocation6], 1

</llo_original>
